<compile_context>
chip_gen: v7x
topology: tpu7x:2x2x1
jax: 0.10.0
libtpu: 0.0.40
codegen_flags: <defaults>
</compile_context>

<pallas_src>
import jax
import jax.numpy as jnp
from jax.experimental import pallas as pl
from jax.experimental.pallas import tpu as pltpu


def gnn_kernel(x_ref, agg_ref, wn_ref, wr_ref, bn_ref, w2_ref, b2_ref, out_ref):
    # x_ref:   (R, L*D)    R = examples_per_block * K, rows ordered (example, node)
    # agg_ref: (R, R)      kron(I_Nb, A^T)  -- per-example neighbour aggregation
    # wn_ref:  (L*D, L*H)  kron(I_L, Wn^T)
    # wr_ref:  (L*D, L*H)  kron(shift_L, Wr^T) -- lin_r with the time shift folded in
    # bn_ref:  (1, L*H)    lin_n bias tiled over time (f32)
    # w2_ref:  (L*H, L*H)  kron(I_L, W2^T)
    # b2_ref:  (1, L*H)    lin_2 bias tiled over time (f32)
    # out_ref: (R, L*H)
    x = x_ref[...]

    # Neighbour aggregation on the MXU: agg[(n,j), :] = sum_k A[k, j] * x[(n,k), :].
    agg = jnp.dot(agg_ref[...], x, preferred_element_type=jnp.float32).astype(x.dtype)

    # lin_n(agg) + lin_r(time-shifted x) + bias, fused elementwise with ReLU.
    hn = jnp.dot(agg, wn_ref[...], preferred_element_type=jnp.float32)
    hn = hn + jnp.dot(x, wr_ref[...], preferred_element_type=jnp.float32)
    act = jnp.maximum(hn + bn_ref[...], 0.0).astype(w2_ref.dtype)

    out = jnp.dot(act, w2_ref[...], preferred_element_type=jnp.float32) + b2_ref[...]
    out_ref[...] = out.astype(out_ref.dtype)


def _pick_examples_per_block(N, K, L, D, itemsize):
    """Whole examples per grid block: sublane-aligned row count, <=~1 MiB of
    input slab and <=512 rows per block (bounds the kron(I_Nb, A^T) operand and
    its extra MACs), preferring >=4 grid steps when the batch is large enough
    for DMA/compute pipelining to matter."""
    sub = 8 if itemsize >= 4 else 16
    row_bytes = L * D * itemsize
    cap_rows = max(sub, min(512, (1 << 20) // max(row_bytes, 1)))

    best = None
    for nb in range(N, 0, -1):                      # largest admissible block first
        if N % nb:
            continue
        rows = nb * K
        if rows <= cap_rows and rows % sub == 0:
            best = nb
            break
    if best is None:
        return N                                    # single full-array block

    if N // best < 4:                               # expose >=4 pipeline steps if cheap
        for nb in range(best - 1, 0, -1):
            if N % nb:
                continue
            rows = nb * K
            if rows % sub == 0 and N // nb >= 4 and rows * row_bytes >= (128 << 10):
                best = nb
                break
    return best


def gnn_forward(h, A, Wn, bn, Wr, W2, b2, *, use_bf16_mxu=False,
                examples_per_block=None):
    N, K, L, D = h.shape
    H = Wn.shape[0]
    f32 = jnp.float32
    mxu_dt = jnp.bfloat16 if use_bf16_mxu else f32   # bf16 recommended on v6e/v7x
    itemsize = jnp.dtype(mxu_dt).itemsize

    if examples_per_block is None or N % examples_per_block != 0:
        examples_per_block = _pick_examples_per_block(N, K, L, D, itemsize)
    Nb = examples_per_block
    R = Nb * K                                       # rows per grid block
    grid = (N // Nb,)

    # Free reshape (contiguous trailing-dim merge): no HBM transpose.
    x = h.reshape(N * K, L * D).astype(mxu_dt)

    # Tiny fused weights; identical for every grid step, so they stay resident
    # in VMEM (index_map returns the same block each step).
    eye_l = jnp.eye(L, dtype=f32)
    shift_l = jnp.eye(L, k=1, dtype=f32)             # shift_l[l-1, l] = 1
    wn_big = jnp.kron(eye_l, Wn.T.astype(f32)).astype(mxu_dt)          # (L*D, L*H)
    wr_big = jnp.kron(shift_l, Wr.T.astype(f32)).astype(mxu_dt)        # (L*D, L*H)
    w2_big = jnp.kron(eye_l, W2.T.astype(f32)).astype(mxu_dt)          # (L*H, L*H)
    agg_m = jnp.kron(jnp.eye(Nb, dtype=f32), A.T.astype(f32)).astype(mxu_dt)  # (R, R)
    bn_big = jnp.tile(bn.astype(f32), L).reshape(1, L * H)
    b2_big = jnp.tile(b2.astype(f32), L).reshape(1, L * H)

    # VMEM budget: double-buffered in/out blocks + resident weights + headroom.
    in_blk = R * L * D * itemsize
    out_blk = R * L * H * 4
    w_bytes = (R * R + 2 * (L * D) * (L * H) + (L * H) ** 2) * itemsize + 2 * L * H * 4
    vmem_est = 2 * (in_blk + out_blk) + w_bytes + (2 << 20)
    vmem_limit = int(min(64 << 20, max(2 * vmem_est, 16 << 20)))

    out = pl.pallas_call(
        gnn_kernel,
        out_shape=jax.ShapeDtypeStruct((N * K, L * H), f32),
        grid_spec=pltpu.PrefetchScalarGridSpec(
            num_scalar_prefetch=0,
            grid=grid,
            in_specs=[
                pl.BlockSpec((R, L * D), lambda b: (b, 0)),       # x block (pipelined)
                pl.BlockSpec((R, R), lambda b: (0, 0)),           # kron(I_Nb, A^T)
                pl.BlockSpec((L * D, L * H), lambda b: (0, 0)),   # kron(I_L, Wn^T)
                pl.BlockSpec((L * D, L * H), lambda b: (0, 0)),   # kron(shift_L, Wr^T)
                pl.BlockSpec((1, L * H), lambda b: (0, 0)),       # bn tiled
                pl.BlockSpec((L * H, L * H), lambda b: (0, 0)),   # kron(I_L, W2^T)
                pl.BlockSpec((1, L * H), lambda b: (0, 0)),       # b2 tiled
            ],
            out_specs=pl.BlockSpec((R, L * H), lambda b: (b, 0)),
        ),
        compiler_params=pltpu.CompilerParams(
            dimension_semantics=("parallel",),
            vmem_limit_bytes=vmem_limit),
    )(x, agg_m, wn_big, wr_big, bn_big, w2_big, b2_big)

    # Free reshape back to (N, K, L, H).
    return out.reshape(N, K, L, H)


def gnn_reference(h, A, Wn, bn, Wr, W2, b2):
    h_n = jnp.einsum('nkld,kj->njld', h, A) @ Wn.T + bn
    h_r = h[:, :, :-1] @ Wr.T
    h_n = h_n.at[:, :, 1:].add(h_r)
    return jnp.maximum(h_n, 0.0) @ W2.T + b2


if __name__ == "__main__":
    key = jax.random.PRNGKey(0)
    N, K, L, D, H = 2, 4, 8, 16, 32   # batch, nodes, seq, input_size, hidden_size
    ks = jax.random.split(key, 7)

    h = jax.random.normal(ks[0], (N, K, L, D), jnp.float32)
    A = jax.random.uniform(ks[1], (K, K), jnp.float32)
    A = A / jnp.sum(A, axis=0, keepdims=True)

    bound_n = 1.0 / (D ** 0.5)
    Wn = jax.random.uniform(ks[2], (H, D), jnp.float32, -bound_n, bound_n)
    bn = jax.random.uniform(ks[3], (H,), jnp.float32, -bound_n, bound_n)
    Wr = jax.random.uniform(ks[4], (H, D), jnp.float32, -bound_n, bound_n)
    bound_2 = 1.0 / (H ** 0.5)
    W2 = jax.random.uniform(ks[5], (H, H), jnp.float32, -bound_2, bound_2)
    b2 = jax.random.uniform(ks[6], (H,), jnp.float32, -bound_2, bound_2)

    out = gnn_forward(h, A, Wn, bn, Wr, W2, b2)
    out = jax.block_until_ready(out)

    ref = gnn_reference(h, A, Wn, bn, Wr, W2, b2)
    assert out.shape == (N, K, L, H)
    if not jnp.allclose(out, ref, rtol=1e-4, atol=1e-4):
        raise AssertionError("Pallas kernel mismatch vs JAX reference")
    print("KERNEL_OK")
</pallas_src>

<mosaic_0001>
module attributes {stable_mosaic.version = 11 : i64} {
  func.func @gnn_kernel(%arg0: i32, %arg1: memref<8x128xf32, #tpu.memory_space<vmem>>, %arg2: memref<8x8xf32, #tpu.memory_space<vmem>>, %arg3: memref<128x256xf32, #tpu.memory_space<vmem>>, %arg4: memref<128x256xf32, #tpu.memory_space<vmem>>, %arg5: memref<1x256xf32, #tpu.memory_space<vmem>>, %arg6: memref<256x256xf32, #tpu.memory_space<vmem>>, %arg7: memref<1x256xf32, #tpu.memory_space<vmem>>, %arg8: memref<8x256xf32, #tpu.memory_space<vmem>>) attributes {dimension_semantics = [#tpu.dimension_semantics<parallel>], iteration_bounds = array<i64: 1>, scalar_prefetch = 0 : i64, scratch_operands = 0 : i64, tpu.core_type = #tpu.core_type<tc>, window_params = [{transform_indices = @transform_0, window_bounds = array<i64: 8, 128>}, {pipeline_mode = #tpu.pipeline_mode<synchronous>, transform_indices = @transform_1, window_bounds = array<i64: 8, 8>}, {pipeline_mode = #tpu.pipeline_mode<synchronous>, transform_indices = @transform_2, window_bounds = array<i64: 128, 256>}, {pipeline_mode = #tpu.pipeline_mode<synchronous>, transform_indices = @transform_3, window_bounds = array<i64: 128, 256>}, {pipeline_mode = #tpu.pipeline_mode<synchronous>, transform_indices = @transform_4, window_bounds = array<i64: 1, 256>}, {pipeline_mode = #tpu.pipeline_mode<synchronous>, transform_indices = @transform_5, window_bounds = array<i64: 256, 256>}, {pipeline_mode = #tpu.pipeline_mode<synchronous>, transform_indices = @transform_6, window_bounds = array<i64: 1, 256>}, {transform_indices = @transform_7, window_bounds = array<i64: 8, 256>}]} {
    %c0 = arith.constant 0 : index
    %c0_0 = arith.constant 0 : index
    %0 = vector.load %arg1[%c0, %c0_0] : memref<8x128xf32, #tpu.memory_space<vmem>>, vector<8x128xf32>
    %c0_1 = arith.constant 0 : index
    %c0_2 = arith.constant 0 : index
    %1 = vector.load %arg2[%c0_1, %c0_2] : memref<8x8xf32, #tpu.memory_space<vmem>>, vector<8x8xf32>
    %cst = arith.constant dense<0.000000e+00> : vector<8x128xf32>
    %2 = tpu.matmul %1, %0, %cst {dimension_numbers = #tpu.dot_dimension_numbers<[1], [0], [0], [1], [0, 0, 1, 1], [], []>} : vector<8x8xf32>, vector<8x128xf32>, vector<8x128xf32> -> vector<8x128xf32>
    %c0_3 = arith.constant 0 : index
    %c0_4 = arith.constant 0 : index
    %3 = vector.load %arg3[%c0_3, %c0_4] : memref<128x256xf32, #tpu.memory_space<vmem>>, vector<128x256xf32>
    %cst_5 = arith.constant dense<0.000000e+00> : vector<8x256xf32>
    %4 = tpu.matmul %2, %3, %cst_5 {dimension_numbers = #tpu.dot_dimension_numbers<[1], [0], [0], [1], [0, 0, 1, 1], [], []>} : vector<8x128xf32>, vector<128x256xf32>, vector<8x256xf32> -> vector<8x256xf32>
    %c0_6 = arith.constant 0 : index
    %c0_7 = arith.constant 0 : index
    %5 = vector.load %arg4[%c0_6, %c0_7] : memref<128x256xf32, #tpu.memory_space<vmem>>, vector<128x256xf32>
    %cst_8 = arith.constant dense<0.000000e+00> : vector<8x256xf32>
    %6 = tpu.matmul %0, %5, %cst_8 {dimension_numbers = #tpu.dot_dimension_numbers<[1], [0], [0], [1], [0, 0, 1, 1], [], []>} : vector<8x128xf32>, vector<128x256xf32>, vector<8x256xf32> -> vector<8x256xf32>
    %7 = arith.addf %4, %6 : vector<8x256xf32>
    %c0_9 = arith.constant 0 : index
    %c0_10 = arith.constant 0 : index
    %8 = vector.load %arg5[%c0_9, %c0_10] : memref<1x256xf32, #tpu.memory_space<vmem>>, vector<1x256xf32>
    %9 = vector.broadcast %8 : vector<1x256xf32> to vector<8x256xf32>
    %10 = arith.addf %7, %9 : vector<8x256xf32>
    %cst_11 = arith.constant 0.000000e+00 : f32
    %11 = vector.broadcast %cst_11 : f32 to vector<8x256xf32>
    %12 = arith.maximumf %10, %11 : vector<8x256xf32>
    %c0_12 = arith.constant 0 : index
    %c0_13 = arith.constant 0 : index
    %13 = vector.load %arg6[%c0_12, %c0_13] : memref<256x256xf32, #tpu.memory_space<vmem>>, vector<256x256xf32>
    %cst_14 = arith.constant dense<0.000000e+00> : vector<8x256xf32>
    %14 = tpu.matmul %12, %13, %cst_14 {dimension_numbers = #tpu.dot_dimension_numbers<[1], [0], [0], [1], [0, 0, 1, 1], [], []>} : vector<8x256xf32>, vector<256x256xf32>, vector<8x256xf32> -> vector<8x256xf32>
    %c0_15 = arith.constant 0 : index
    %c0_16 = arith.constant 0 : index
    %15 = vector.load %arg7[%c0_15, %c0_16] : memref<1x256xf32, #tpu.memory_space<vmem>>, vector<1x256xf32>
    %16 = vector.broadcast %15 : vector<1x256xf32> to vector<8x256xf32>
    %17 = arith.addf %14, %16 : vector<8x256xf32>
    %c0_17 = arith.constant 0 : index
    %c0_18 = arith.constant 0 : index
    %18 = vector.load %arg8[%c0_17, %c0_18] : memref<8x256xf32, #tpu.memory_space<vmem>>, vector<8x256xf32>
    tpu.vector_store %arg8[%c0_17, %c0_18], %17 {strides = array<i32>} : memref<8x256xf32, #tpu.memory_space<vmem>>, vector<8x256xf32>,
    return
  }
  func.func @transform_0(%arg0: i32) -> (i32, i32) {
    %c0_i32 = arith.constant 0 : i32
    %c0_i32_0 = arith.constant 0 : i32
    return %arg0, %c0_i32 : i32, i32
  }
  func.func @transform_1(%arg0: i32) -> (i32, i32) {
    %c0_i32 = arith.constant 0 : i32
    %c0_i32_0 = arith.constant 0 : i32
    %c0_i32_1 = arith.constant 0 : i32
    return %c0_i32, %c0_i32_0 : i32, i32
  }
  func.func @transform_2(%arg0: i32) -> (i32, i32) {
    %c0_i32 = arith.constant 0 : i32
    %c0_i32_0 = arith.constant 0 : i32
    %c0_i32_1 = arith.constant 0 : i32
    return %c0_i32, %c0_i32_0 : i32, i32
  }
  func.func @transform_3(%arg0: i32) -> (i32, i32) {
    %c0_i32 = arith.constant 0 : i32
    %c0_i32_0 = arith.constant 0 : i32
    %c0_i32_1 = arith.constant 0 : i32
    return %c0_i32, %c0_i32_0 : i32, i32
  }
  func.func @transform_4(%arg0: i32) -> (i32, i32) {
    %c0_i32 = arith.constant 0 : i32
    %c0_i32_0 = arith.constant 0 : i32
    %c0_i32_1 = arith.constant 0 : i32
    return %c0_i32, %c0_i32_0 : i32, i32
  }
  func.func @transform_5(%arg0: i32) -> (i32, i32) {
    %c0_i32 = arith.constant 0 : i32
    %c0_i32_0 = arith.constant 0 : i32
    %c0_i32_1 = arith.constant 0 : i32
    return %c0_i32, %c0_i32_0 : i32, i32
  }
  func.func @transform_6(%arg0: i32) -> (i32, i32) {
    %c0_i32 = arith.constant 0 : i32
    %c0_i32_0 = arith.constant 0 : i32
    %c0_i32_1 = arith.constant 0 : i32
    return %c0_i32, %c0_i32_0 : i32, i32
  }
  func.func @transform_7(%arg0: i32) -> (i32, i32) {
    %c0_i32 = arith.constant 0 : i32
    %c0_i32_0 = arith.constant 0 : i32
    return %arg0, %c0_i32 : i32, i32
  }
}

</mosaic_0001>

<llo_original>
// kernel: tpu_custom_call.1
$region0: #{tpu_custom_call.1}
  #allocation0 [shape = 'u32[]', space=smem, size = 0x4, offset = 0x4, fixed_abs, tag = 'smem constant byte address 0x4 - core index']
  #allocation1 [shape = 'u32[144,128]{1,0:T(1,128)}', space=vmem, size = 0x12000, scoped, tag = 'internal scratch']
  %s0 = inlined_call_operand.hbm [shape: f32[8,128], index: 0, kind: input, shape index: {}]
  %s1 = inlined_call_operand.hbm [shape: f32[8,8], index: 1, kind: input, shape index: {}]
  %s2 = inlined_call_operand.hbm [shape: f32[128,256], index: 2, kind: input, shape index: {}]
  %s3 = inlined_call_operand.hbm [shape: f32[128,256], index: 3, kind: input, shape index: {}]
  %s4 = inlined_call_operand.vmem [shape: f32[1,256], index: 4, kind: input, shape index: {}]
  %s5 = inlined_call_operand.hbm [shape: f32[256,256], index: 5, kind: input, shape index: {}]
  %s6 = inlined_call_operand.vmem [shape: f32[1,256], index: 6, kind: input, shape index: {}]
  %s7 = inlined_call_operand.hbm [shape: f32[8,256], index: 7, kind: output, shape index: {}]
  %s8 = sld [smem:[#allocation0]]
  $region58: #{tpu_custom_call.1} parent=0
    _
  %s10 = ssub.s32 1, %s8
  %s11 = scalar_select 0, %s10, %s8
  $region1: #{tpu_custom_call.1} parent=0
    #allocation2 [shape = 'u8[4096]{0}', space=vmem, size = 0x1000, scoped, tag = 'input window, operand 0, single buffered']
    #allocation3 [shape = 's32[1]{0}', space=sflag, size = 0x4, scoped, tag = 'scoped memory for tpu_custom_call.1']
    #allocation4 [shape = 's32[1]{0}', space=sflag, size = 0x4, scoped, tag = 'scoped memory for tpu_custom_call.1']
    #allocation5 [shape = 'u8[4096]{0}', space=vmem, size = 0x1000, scoped, tag = 'input window, operand 1, single buffered']
    #allocation6 [shape = 's32[1]{0}', space=sflag, size = 0x4, scoped, tag = 'scoped memory for tpu_custom_call.1']
    #allocation7 [shape = 'u8[131072]{0}', space=vmem, size = 0x20000, scoped, tag = 'input window, operand 2, single buffered']
    #allocation8 [shape = 'u8[131072]{0}', space=vmem, size = 0x20000, scoped, tag = 'input window, operand 3, single buffered']
    #allocation9 [shape = 's32[1]{0}', space=sflag, size = 0x4, scoped, tag = 'scoped memory for tpu_custom_call.1']
    #allocation10 [shape = 'u8[262144]{0}', space=vmem, size = 0x40000, scoped, tag = 'input window, operand 5, single buffered']
    #allocation11 [shape = 'u8[8192]{0}', space=vmem, size = 0x2000, scoped, tag = 'output window, operand 0, single buffered']
    %12 = vsyncpa [#allocation3], 0
    %13 = vsyncpa [#allocation6], 0
    %14 = vsyncpa [#allocation9], 0
    %15 = vsyncpa [#allocation4], 0
    // Predicated region
    $region2: #{tpu_custom_call.1} parent=1 // pred_check
      _
    $region3: #{tpu_custom_call.1} parent=1 // pred_check_branch
      %17 = sbr.rel (0) target = $region5
    $region4: #{tpu_custom_call.1} parent=1 // pred_region
      %s19 = ssub.s32 128, 128
      %20 = vsyncadd [#allocation3], %s19
      %s22 = sshll.u32 [#allocation2], 4
      %s23 = int_to_ptr.vmem [resolvable:$true] %s22
      %25 = dma.hbm_to_vmem [thread:$0]  %s0, 128, %s23, [#allocation3]
    $region5: #{tpu_custom_call.1} parent=1 // pred_fallthru
      _
    // Predicated region
    $region6: #{tpu_custom_call.1} parent=1 // pred_check
      _
    $region7: #{tpu_custom_call.1} parent=1 // pred_check_branch
      %27 = sbr.rel (0) target = $region9
    $region8: #{tpu_custom_call.1} parent=1 // pred_region
      %s29 = ssub.s32 128, 128
      %30 = vsyncadd [#allocation6], %s29
      %s32 = sshll.u32 [#allocation5], 4
      %s33 = int_to_ptr.vmem [resolvable:$true] %s32
      %35 = dma.hbm_to_vmem [thread:$0]  %s1, 128, %s33, [#allocation6]
    $region9: #{tpu_custom_call.1} parent=1 // pred_fallthru
      _
    // Predicated region
    $region10: #{tpu_custom_call.1} parent=1 // pred_check
      _
    $region11: #{tpu_custom_call.1} parent=1 // pred_check_branch
      %37 = sbr.rel (0) target = $region13
    $region12: #{tpu_custom_call.1} parent=1 // pred_region
      %s39 = ssub.s32 4096, 4096
      %40 = vsyncadd [#allocation6], %s39
      %s41 = sshll.u32 [#allocation7], 4
      %s42 = int_to_ptr.vmem [resolvable:$true] %s41
      %47 = dma.hbm_to_vmem [thread:$0]  %s2, 4096, %s42, [#allocation6], 256, 256, 16
    $region13: #{tpu_custom_call.1} parent=1 // pred_fallthru
      _
    // Predicated region
    $region14: #{tpu_custom_call.1} parent=1 // pred_check
      _
    $region15: #{tpu_custom_call.1} parent=1 // pred_check_branch
      %49 = sbr.rel (0) target = $region17
    $region16: #{tpu_custom_call.1} parent=1 // pred_region
      %s51 = ssub.s32 4096, 4096
      %52 = vsyncadd [#allocation9], %s51
      %s53 = sshll.u32 [#allocation8], 4
      %s54 = int_to_ptr.vmem [resolvable:$true] %s53
      %59 = dma.hbm_to_vmem [thread:$0]  %s3, 4096, %s54, [#allocation9], 256, 256, 16
    $region17: #{tpu_custom_call.1} parent=1 // pred_fallthru
      _
    // Predicated region
    $region18: #{tpu_custom_call.1} parent=1 // pred_check
      _
    $region19: #{tpu_custom_call.1} parent=1 // pred_check_branch
      %61 = sbr.rel (0) target = $region21
    $region20: #{tpu_custom_call.1} parent=1 // pred_region
      _
    $region21: #{tpu_custom_call.1} parent=1 // pred_fallthru
      _
    // Predicated region
    $region22: #{tpu_custom_call.1} parent=1 // pred_check
      _
    $region23: #{tpu_custom_call.1} parent=1 // pred_check_branch
      %63 = sbr.rel (0) target = $region25
    $region24: #{tpu_custom_call.1} parent=1 // pred_region
      %s65 = ssub.s32 8192, 8192
      %66 = vsyncadd [#allocation9], %s65
      %s67 = sshll.u32 [#allocation10], 4
      %s68 = int_to_ptr.vmem [resolvable:$true] %s67
      %73 = dma.hbm_to_vmem [thread:$0]  %s5, 8192, %s68, [#allocation9], 256, 256, 16
    $region25: #{tpu_custom_call.1} parent=1 // pred_fallthru
      _
    // Predicated region
    $region26: #{tpu_custom_call.1} parent=1 // pred_check
      _
    $region27: #{tpu_custom_call.1} parent=1 // pred_check_branch
      %75 = sbr.rel (0) target = $region29
    $region28: #{tpu_custom_call.1} parent=1 // pred_region
      _
    $region29: #{tpu_custom_call.1} parent=1 // pred_fallthru
      _
    // Predicated region
    $region30: #{tpu_custom_call.1} parent=1 // pred_check
      _
    $region31: #{tpu_custom_call.1} parent=1 // pred_check_branch
      %77 = sbr.rel (0) target = $region33
    $region32: #{tpu_custom_call.1} parent=1 // pred_region
      %78 = dma.done [#allocation3], 128
    $region33: #{tpu_custom_call.1} parent=1 // pred_fallthru
      _
    // Predicated region
    $region34: #{tpu_custom_call.1} parent=1 // pred_check
      _
    $region35: #{tpu_custom_call.1} parent=1 // pred_check_branch
      %80 = sbr.rel (0) target = $region37
    $region36: #{tpu_custom_call.1} parent=1 // pred_region
      %81 = dma.done [#allocation6], 128
    $region37: #{tpu_custom_call.1} parent=1 // pred_fallthru
      _
    // Predicated region
    $region38: #{tpu_custom_call.1} parent=1 // pred_check
      _
    $region39: #{tpu_custom_call.1} parent=1 // pred_check_branch
      %83 = sbr.rel (0) target = $region41
    $region40: #{tpu_custom_call.1} parent=1 // pred_region
      %84 = dma.done [#allocation6], 4096
    $region41: #{tpu_custom_call.1} parent=1 // pred_fallthru
      _
    // Predicated region
    $region42: #{tpu_custom_call.1} parent=1 // pred_check
      _
    $region43: #{tpu_custom_call.1} parent=1 // pred_check_branch
      %86 = sbr.rel (0) target = $region45
    $region44: #{tpu_custom_call.1} parent=1 // pred_region
      %87 = dma.done [#allocation9], 4096
    $region45: #{tpu_custom_call.1} parent=1 // pred_fallthru
      _
    // Predicated region
    $region46: #{tpu_custom_call.1} parent=1 // pred_check
      _
    $region47: #{tpu_custom_call.1} parent=1 // pred_check_branch
      %89 = sbr.rel (0) target = $region49
    $region48: #{tpu_custom_call.1} parent=1 // pred_region
      %90 = dma.done [#allocation9], 8192
    $region49: #{tpu_custom_call.1} parent=1 // pred_fallthru
      _
    %v91 = vld [vmem:[#allocation2] sm:$0xff]
    %v92 = vld [vmem:[#allocation5] sm:$0xff]
    %vm93 = vcmask 64512
    %v95 = vsel %vm93, %v92, 0
    %97 = vmatprep.subr.mxu0 0.0
    %98 = vmatpush1.msra.mxu0 %v91
    %99 = vmatprep.subr.mxu0 0.0
    %100 = vmatpush1.msra.mxu0 0.0
    %101 = vmatprep.subr.mxu0 0.0
    %102 = vmatpush1.msra.mxu0 0.0
    %103 = vmatprep.subr.mxu0 0.0
    %104 = vmatpush1.msra.mxu0 0.0
    %105 = vmatprep.subr.mxu0 0.0
    %106 = vmatpush1.msra.mxu0 0.0
    %107 = vmatprep.subr.mxu0 0.0
    %108 = vmatpush1.msra.mxu0 0.0
    %109 = vmatprep.subr.mxu0 0.0
    %110 = vmatpush1.msra.mxu0 0.0
    %111 = vmatprep.subr.mxu0 0.0
    %112 = vmatpush1.msra.mxu0 0.0
    %113 = vmatprep.subr.mxu0 0.0
    %114 = vmatpush1.msra.mxu0 0.0
    %115 = vmatprep.subr.mxu0 0.0
    %116 = vmatpush1.msra.mxu0 0.0
    %117 = vmatprep.subr.mxu0 0.0
    %118 = vmatpush1.msra.mxu0 0.0
    %119 = vmatprep.subr.mxu0 0.0
    %120 = vmatpush1.msra.mxu0 0.0
    %121 = vmatprep.subr.mxu0 0.0
    %122 = vmatpush1.msra.mxu0 0.0
    %123 = vmatprep.subr.mxu0 0.0
    %124 = vmatpush1.msra.mxu0 0.0
    %125 = vmatprep.subr.mxu0 0.0
    %126 = vmatpush1.msra.mxu0 0.0
    %127 = vmatprep.subr.mxu0 0.0
    %128 = vmatpush1.msra.mxu0 0.0
    %129 = vmatprep.subr.mxu0 0.0
    %130 = vmatpush1.msra.mxu0 0.0
    %131 = vmatprep.subr.mxu0 0.0
    %132 = vmatpush1.msra.mxu0 0.0
    %133 = vmatprep.subr.mxu0 0.0
    %134 = vmatpush1.msra.mxu0 0.0
    %135 = vmatprep.subr.mxu0 0.0
    %136 = vmatpush1.msra.mxu0 0.0
    %137 = vmatprep.subr.mxu0 0.0
    %138 = vmatpush1.msra.mxu0 0.0
    %139 = vmatprep.subr.mxu0 0.0
    %140 = vmatpush1.msra.mxu0 0.0
    %141 = vmatprep.subr.mxu0 0.0
    %142 = vmatpush1.msra.mxu0 0.0
    %143 = vmatprep.subr.mxu0 0.0
    %144 = vmatpush1.msra.mxu0 0.0
    %145 = vmatprep.subr.mxu0 0.0
    %146 = vmatpush1.msra.mxu0 0.0
    %147 = vmatprep.subr.mxu0 0.0
    %148 = vmatpush1.msra.mxu0 0.0
    %149 = vmatprep.subr.mxu0 0.0
    %150 = vmatpush1.msra.mxu0 0.0
    %151 = vmatprep.subr.mxu0 0.0
    %152 = vmatpush1.msra.mxu0 0.0
    %153 = vmatprep.subr.mxu0 0.0
    %154 = vmatpush1.msra.mxu0 0.0
    %155 = vmatprep.subr.mxu0 0.0
    %156 = vmatpush1.msra.mxu0 0.0
    %157 = vmatprep.subr.mxu0 0.0
    %158 = vmatpush1.msra.mxu0 0.0
    %159 = vmatprep.subr.mxu0 0.0
    %160 = vmatpush1.msra.mxu0 0.0
    %161 = vmatprep.mubr.f32.mxu0 0.0
    %162 = vmatmul.mubr.f32.gmra.mrb[0].mxu0 %v95
    %v163 = vpop.f32.mrb[0].mxu0
    %v164 = vadd.f32 0.0, %v163
    %v165 = vpop.f32.mrb[0].mxu0
    %166 = vdwg.mxu0
    %v167 = vld [vmem:[#allocation7] sm:$0xff]
    %v168 = vld [vmem:[#allocation7 + $0x8] sm:$0xff]
    %v169 = vld [vmem:[#allocation7 + $0x10] sm:$0xff]
    %v170 = vld [vmem:[#allocation7 + $0x18] sm:$0xff]
    %v171 = vld [vmem:[#allocation7 + $0x20] sm:$0xff]
    %v172 = vld [vmem:[#allocation7 + $0x28] sm:$0xff]
    %v173 = vld [vmem:[#allocation7 + $0x30] sm:$0xff]
    %v174 = vld [vmem:[#allocation7 + $0x38] sm:$0xff]
    %v175 = vld [vmem:[#allocation7 + $0x40] sm:$0xff]
    %v176 = vld [vmem:[#allocation7 + $0x48] sm:$0xff]
    %v177 = vld [vmem:[#allocation7 + $0x50] sm:$0xff]
    %v178 = vld [vmem:[#allocation7 + $0x58] sm:$0xff]
    %v179 = vld [vmem:[#allocation7 + $0x60] sm:$0xff]
    %v180 = vld [vmem:[#allocation7 + $0x68] sm:$0xff]
    %v181 = vld [vmem:[#allocation7 + $0x70] sm:$0xff]
    %v182 = vld [vmem:[#allocation7 + $0x78] sm:$0xff]
    %v183 = vld [vmem:[#allocation7 + $0x80] sm:$0xff]
    %v184 = vld [vmem:[#allocation7 + $0x88] sm:$0xff]
    %v185 = vld [vmem:[#allocation7 + $0x90] sm:$0xff]
    %v186 = vld [vmem:[#allocation7 + $0x98] sm:$0xff]
    %v187 = vld [vmem:[#allocation7 + $0xa0] sm:$0xff]
    %v188 = vld [vmem:[#allocation7 + $0xa8] sm:$0xff]
    %v189 = vld [vmem:[#allocation7 + $0xb0] sm:$0xff]
    %v190 = vld [vmem:[#allocation7 + $0xb8] sm:$0xff]
    %v191 = vld [vmem:[#allocation7 + $0xc0] sm:$0xff]
    %v192 = vld [vmem:[#allocation7 + $0xc8] sm:$0xff]
    %v193 = vld [vmem:[#allocation7 + $0xd0] sm:$0xff]
    %v194 = vld [vmem:[#allocation7 + $0xd8] sm:$0xff]
    %v195 = vld [vmem:[#allocation7 + $0xe0] sm:$0xff]
    %v196 = vld [vmem:[#allocation7 + $0xe8] sm:$0xff]
    %v197 = vld [vmem:[#allocation7 + $0xf0] sm:$0xff]
    %v198 = vld [vmem:[#allocation7 + $0xf8] sm:$0xff]
    %v199 = vld [vmem:[#allocation8] sm:$0xff]
    %v200 = vld [vmem:[#allocation8 + $0x8] sm:$0xff]
    %v201 = vld [vmem:[#allocation8 + $0x10] sm:$0xff]
    %v202 = vld [vmem:[#allocation8 + $0x18] sm:$0xff]
    %v203 = vld [vmem:[#allocation8 + $0x20] sm:$0xff]
    %v204 = vld [vmem:[#allocation8 + $0x28] sm:$0xff]
    %v205 = vld [vmem:[#allocation8 + $0x30] sm:$0xff]
    %v206 = vld [vmem:[#allocation8 + $0x38] sm:$0xff]
    %v207 = vld [vmem:[#allocation8 + $0x40] sm:$0xff]
    %v208 = vld [vmem:[#allocation8 + $0x48] sm:$0xff]
    %v209 = vld [vmem:[#allocation8 + $0x50] sm:$0xff]
    %v210 = vld [vmem:[#allocation8 + $0x58] sm:$0xff]
    %v211 = vld [vmem:[#allocation8 + $0x60] sm:$0xff]
    %v212 = vld [vmem:[#allocation8 + $0x68] sm:$0xff]
    %v213 = vld [vmem:[#allocation8 + $0x70] sm:$0xff]
    %v214 = vld [vmem:[#allocation8 + $0x78] sm:$0xff]
    %v215 = vld [vmem:[#allocation8 + $0x80] sm:$0xff]
    %v216 = vld [vmem:[#allocation8 + $0x88] sm:$0xff]
    %v217 = vld [vmem:[#allocation8 + $0x90] sm:$0xff]
    %v218 = vld [vmem:[#allocation8 + $0x98] sm:$0xff]
    %v219 = vld [vmem:[#allocation8 + $0xa0] sm:$0xff]
    %v220 = vld [vmem:[#allocation8 + $0xa8] sm:$0xff]
    %v221 = vld [vmem:[#allocation8 + $0xb0] sm:$0xff]
    %v222 = vld [vmem:[#allocation8 + $0xb8] sm:$0xff]
    %v223 = vld [vmem:[#allocation8 + $0xc0] sm:$0xff]
    %v224 = vld [vmem:[#allocation8 + $0xc8] sm:$0xff]
    %v225 = vld [vmem:[#allocation8 + $0xd0] sm:$0xff]
    %v226 = vld [vmem:[#allocation8 + $0xd8] sm:$0xff]
    %v227 = vld [vmem:[#allocation8 + $0xe0] sm:$0xff]
    %v228 = vld [vmem:[#allocation8 + $0xe8] sm:$0xff]
    %v229 = vld [vmem:[#allocation8 + $0xf0] sm:$0xff]
    %v230 = vld [vmem:[#allocation8 + $0xf8] sm:$0xff]
    %231 = vmatprep.subr.mxu0 %v200
    %232 = vmatpush1.msra.mxu0 %v199
    %233 = vmatprep.subr.mxu0 %v202
    %234 = vmatpush1.msra.mxu0 %v201
    %235 = vmatprep.subr.mxu0 %v204
    %236 = vmatpush1.msra.mxu0 %v203
    %237 = vmatprep.subr.mxu0 %v206
    %238 = vmatpush1.msra.mxu0 %v205
    %239 = vmatprep.subr.mxu0 %v208
    %240 = vmatpush1.msra.mxu0 %v207
    %241 = vmatprep.subr.mxu0 %v210
    %242 = vmatpush1.msra.mxu0 %v209
    %243 = vmatprep.subr.mxu0 %v212
    %244 = vmatpush1.msra.mxu0 %v211
    %245 = vmatprep.subr.mxu0 %v214
    %246 = vmatpush1.msra.mxu0 %v213
    %247 = vmatprep.subr.mxu0 %v216
    %248 = vmatpush1.msra.mxu0 %v215
    %249 = vmatprep.subr.mxu0 %v218
    %250 = vmatpush1.msra.mxu0 %v217
    %251 = vmatprep.subr.mxu0 %v220
    %252 = vmatpush1.msra.mxu0 %v219
    %253 = vmatprep.subr.mxu0 %v222
    %254 = vmatpush1.msra.mxu0 %v221
    %255 = vmatprep.subr.mxu0 %v224
    %256 = vmatpush1.msra.mxu0 %v223
    %257 = vmatprep.subr.mxu0 %v226
    %258 = vmatpush1.msra.mxu0 %v225
    %259 = vmatprep.subr.mxu0 %v228
    %260 = vmatpush1.msra.mxu0 %v227
    %261 = vmatprep.subr.mxu0 %v230
    %262 = vmatpush1.msra.mxu0 %v229
    %263 = vmatprep.subr.mxu0 0.0
    %264 = vmatpush1.msra.mxu0 0.0
    %265 = vmatprep.subr.mxu0 0.0
    %266 = vmatpush1.msra.mxu0 0.0
    %267 = vmatprep.subr.mxu0 0.0
    %268 = vmatpush1.msra.mxu0 0.0
    %269 = vmatprep.subr.mxu0 0.0
    %270 = vmatpush1.msra.mxu0 0.0
    %271 = vmatprep.subr.mxu0 0.0
    %272 = vmatpush1.msra.mxu0 0.0
    %273 = vmatprep.subr.mxu0 0.0
    %274 = vmatpush1.msra.mxu0 0.0
    %275 = vmatprep.subr.mxu0 0.0
    %276 = vmatpush1.msra.mxu0 0.0
    %277 = vmatprep.subr.mxu0 0.0
    %278 = vmatpush1.msra.mxu0 0.0
    %279 = vmatprep.subr.mxu0 0.0
    %280 = vmatpush1.msra.mxu0 0.0
    %281 = vmatprep.subr.mxu0 0.0
    %282 = vmatpush1.msra.mxu0 0.0
    %283 = vmatprep.subr.mxu0 0.0
    %284 = vmatpush1.msra.mxu0 0.0
    %285 = vmatprep.subr.mxu0 0.0
    %286 = vmatpush1.msra.mxu0 0.0
    %287 = vmatprep.subr.mxu0 0.0
    %288 = vmatpush1.msra.mxu0 0.0
    %289 = vmatprep.subr.mxu0 0.0
    %290 = vmatpush1.msra.mxu0 0.0
    %291 = vmatprep.subr.mxu0 0.0
    %292 = vmatpush1.msra.mxu0 0.0
    %293 = vmatprep.subr.mxu0 0.0
    %294 = vmatpush1.msra.mxu0 0.0
    %295 = vmatprep.mubr.f32.mxu0 0.0
    %296 = vmatmul.mubr.f32.gmra.mrb[0].mxu0 %v91
    %v297 = vpop.f32.mrb[0].mxu0
    %v298 = vadd.f32 0.0, %v297
    %v299 = vpop.f32.mrb[0].mxu0
    %v300 = vadd.f32 0.0, %v299
    %301 = vdwg.mxu0
    %302 = vmatprep.subr.mxu0 %v168
    %303 = vmatpush1.msra.mxu0 %v167
    %304 = vmatprep.subr.mxu0 %v170
    %305 = vmatpush1.msra.mxu0 %v169
    %306 = vmatprep.subr.mxu0 %v172
    %307 = vmatpush1.msra.mxu0 %v171
    %308 = vmatprep.subr.mxu0 %v174
    %309 = vmatpush1.msra.mxu0 %v173
    %310 = vmatprep.subr.mxu0 %v176
    %311 = vmatpush1.msra.mxu0 %v175
    %312 = vmatprep.subr.mxu0 %v178
    %313 = vmatpush1.msra.mxu0 %v177
    %314 = vmatprep.subr.mxu0 %v180
    %315 = vmatpush1.msra.mxu0 %v179
    %316 = vmatprep.subr.mxu0 %v182
    %317 = vmatpush1.msra.mxu0 %v181
    %318 = vmatprep.subr.mxu0 %v184
    %319 = vmatpush1.msra.mxu0 %v183
    %320 = vmatprep.subr.mxu0 %v186
    %321 = vmatpush1.msra.mxu0 %v185
    %322 = vmatprep.subr.mxu0 %v188
    %323 = vmatpush1.msra.mxu0 %v187
    %324 = vmatprep.subr.mxu0 %v190
    %325 = vmatpush1.msra.mxu0 %v189
    %326 = vmatprep.subr.mxu0 %v192
    %327 = vmatpush1.msra.mxu0 %v191
    %328 = vmatprep.subr.mxu0 %v194
    %329 = vmatpush1.msra.mxu0 %v193
    %330 = vmatprep.subr.mxu0 %v196
    %331 = vmatpush1.msra.mxu0 %v195
    %332 = vmatprep.subr.mxu0 %v198
    %333 = vmatpush1.msra.mxu0 %v197
    %334 = vmatprep.subr.mxu0 0.0
    %335 = vmatpush1.msra.mxu0 0.0
    %336 = vmatprep.subr.mxu0 0.0
    %337 = vmatpush1.msra.mxu0 0.0
    %338 = vmatprep.subr.mxu0 0.0
    %339 = vmatpush1.msra.mxu0 0.0
    %340 = vmatprep.subr.mxu0 0.0
    %341 = vmatpush1.msra.mxu0 0.0
    %342 = vmatprep.subr.mxu0 0.0
    %343 = vmatpush1.msra.mxu0 0.0
    %344 = vmatprep.subr.mxu0 0.0
    %345 = vmatpush1.msra.mxu0 0.0
    %346 = vmatprep.subr.mxu0 0.0
    %347 = vmatpush1.msra.mxu0 0.0
    %348 = vmatprep.subr.mxu0 0.0
    %349 = vmatpush1.msra.mxu0 0.0
    %350 = vmatprep.subr.mxu0 0.0
    %351 = vmatpush1.msra.mxu0 0.0
    %352 = vmatprep.subr.mxu0 0.0
    %353 = vmatpush1.msra.mxu0 0.0
    %354 = vmatprep.subr.mxu0 0.0
    %355 = vmatpush1.msra.mxu0 0.0
    %356 = vmatprep.subr.mxu0 0.0
    %357 = vmatpush1.msra.mxu0 0.0
    %358 = vmatprep.subr.mxu0 0.0
    %359 = vmatpush1.msra.mxu0 0.0
    %360 = vmatprep.subr.mxu0 0.0
    %361 = vmatpush1.msra.mxu0 0.0
    %362 = vmatprep.subr.mxu0 0.0
    %363 = vmatpush1.msra.mxu0 0.0
    %364 = vmatprep.subr.mxu0 0.0
    %365 = vmatpush1.msra.mxu0 0.0
    %366 = vmatprep.mubr.f32.mxu0 0.0
    %367 = vmatmul.mubr.f32.gmra.mrb[0].mxu0 %v164
    %v368 = vpop.f32.mrb[0].mxu0
    %v369 = vadd.f32 %v298, %v368
    %v370 = vpop.f32.mrb[0].mxu0
    %v371 = vadd.f32 %v300, %v370
    %372 = vdwg.mxu0
    %v373 = vld [vmem:[%s4] sm:$0x3]
    %v375 = vlaneseq
    %v376 = vshrl.u32 %v375, 7
    %v377 = vsub.s32 0, %v376
    %v378 = vrot.slane %v373, %v377
    %v379 = vlaneseq
    %v380 = vshrl.u32 %v379, 7
    %v381 = vsub.s32 1, %v380
    %v382 = vrot.slane %v373, %v381
    %v385 = vadd.f32 %v369, %v378
    %v386 = vadd.f32 %v371, %v382
    %v387 = vmax.f32 %v385, 0.0
    %v388 = vmax.f32 %v386, 0.0
    %v389 = vld [vmem:[#allocation10] sm:$0xff]
    %v390 = vld [vmem:[#allocation10 + $0x8] sm:$0xff]
    %v391 = vld [vmem:[#allocation10 + $0x10] sm:$0xff]
    %v392 = vld [vmem:[#allocation10 + $0x18] sm:$0xff]
    %v393 = vld [vmem:[#allocation10 + $0x20] sm:$0xff]
    %v394 = vld [vmem:[#allocation10 + $0x28] sm:$0xff]
    %v395 = vld [vmem:[#allocation10 + $0x30] sm:$0xff]
    %v396 = vld [vmem:[#allocation10 + $0x38] sm:$0xff]
    %v397 = vld [vmem:[#allocation10 + $0x40] sm:$0xff]
    %v398 = vld [vmem:[#allocation10 + $0x48] sm:$0xff]
    %v399 = vld [vmem:[#allocation10 + $0x50] sm:$0xff]
    %v400 = vld [vmem:[#allocation10 + $0x58] sm:$0xff]
    %v401 = vld [vmem:[#allocation10 + $0x60] sm:$0xff]
    %v402 = vld [vmem:[#allocation10 + $0x68] sm:$0xff]
    %v403 = vld [vmem:[#allocation10 + $0x70] sm:$0xff]
    %v404 = vld [vmem:[#allocation10 + $0x78] sm:$0xff]
    %v405 = vld [vmem:[#allocation10 + $0x80] sm:$0xff]
    %v406 = vld [vmem:[#allocation10 + $0x88] sm:$0xff]
    %v407 = vld [vmem:[#allocation10 + $0x90] sm:$0xff]
    %v408 = vld [vmem:[#allocation10 + $0x98] sm:$0xff]
    %v409 = vld [vmem:[#allocation10 + $0xa0] sm:$0xff]
    %v410 = vld [vmem:[#allocation10 + $0xa8] sm:$0xff]
    %v411 = vld [vmem:[#allocation10 + $0xb0] sm:$0xff]
    %v412 = vld [vmem:[#allocation10 + $0xb8] sm:$0xff]
    %v413 = vld [vmem:[#allocation10 + $0xc0] sm:$0xff]
    %v414 = vld [vmem:[#allocation10 + $0xc8] sm:$0xff]
    %v415 = vld [vmem:[#allocation10 + $0xd0] sm:$0xff]
    %v416 = vld [vmem:[#allocation10 + $0xd8] sm:$0xff]
    %v417 = vld [vmem:[#allocation10 + $0xe0] sm:$0xff]
    %v418 = vld [vmem:[#allocation10 + $0xe8] sm:$0xff]
    %v419 = vld [vmem:[#allocation10 + $0xf0] sm:$0xff]
    %v420 = vld [vmem:[#allocation10 + $0xf8] sm:$0xff]
    %v421 = vld [vmem:[#allocation10 + $0x100] sm:$0xff]
    %v422 = vld [vmem:[#allocation10 + $0x108] sm:$0xff]
    %v423 = vld [vmem:[#allocation10 + $0x110] sm:$0xff]
    %v424 = vld [vmem:[#allocation10 + $0x118] sm:$0xff]
    %v425 = vld [vmem:[#allocation10 + $0x120] sm:$0xff]
    %v426 = vld [vmem:[#allocation10 + $0x128] sm:$0xff]
    %v427 = vld [vmem:[#allocation10 + $0x130] sm:$0xff]
    %v428 = vld [vmem:[#allocation10 + $0x138] sm:$0xff]
    %v429 = vld [vmem:[#allocation10 + $0x140] sm:$0xff]
    %v430 = vld [vmem:[#allocation10 + $0x148] sm:$0xff]
    %v431 = vld [vmem:[#allocation10 + $0x150] sm:$0xff]
    %v432 = vld [vmem:[#allocation10 + $0x158] sm:$0xff]
    %v433 = vld [vmem:[#allocation10 + $0x160] sm:$0xff]
    %v434 = vld [vmem:[#allocation10 + $0x168] sm:$0xff]
    %v435 = vld [vmem:[#allocation10 + $0x170] sm:$0xff]
    %v436 = vld [vmem:[#allocation10 + $0x178] sm:$0xff]
    %v437 = vld [vmem:[#allocation10 + $0x180] sm:$0xff]
    %v438 = vld [vmem:[#allocation10 + $0x188] sm:$0xff]
    %v439 = vld [vmem:[#allocation10 + $0x190] sm:$0xff]
    %v440 = vld [vmem:[#allocation10 + $0x198] sm:$0xff]
    %v441 = vld [vmem:[#allocation10 + $0x1a0] sm:$0xff]
    %v442 = vld [vmem:[#allocation10 + $0x1a8] sm:$0xff]
    %v443 = vld [vmem:[#allocation10 + $0x1b0] sm:$0xff]
    %v444 = vld [vmem:[#allocation10 + $0x1b8] sm:$0xff]
    %v445 = vld [vmem:[#allocation10 + $0x1c0] sm:$0xff]
    %v446 = vld [vmem:[#allocation10 + $0x1c8] sm:$0xff]
    %v447 = vld [vmem:[#allocation10 + $0x1d0] sm:$0xff]
    %v448 = vld [vmem:[#allocation10 + $0x1d8] sm:$0xff]
    %v449 = vld [vmem:[#allocation10 + $0x1e0] sm:$0xff]
    %v450 = vld [vmem:[#allocation10 + $0x1e8] sm:$0xff]
    %v451 = vld [vmem:[#allocation10 + $0x1f0] sm:$0xff]
    %v452 = vld [vmem:[#allocation10 + $0x1f8] sm:$0xff]
    %v453 = vld [vmem:[%s6] sm:$0x3]
    %v455 = vlaneseq
    %v456 = vshrl.u32 %v455, 7
    %v457 = vsub.s32 0, %v456
    %v458 = vrot.slane %v453, %v457
    %v459 = vlaneseq
    %v460 = vshrl.u32 %v459, 7
    %v461 = vsub.s32 1, %v460
    %v462 = vrot.slane %v453, %v461
    %465 = vmatprep.subr.mxu0 %v390
    %466 = vmatpush1.msra.mxu0 %v389
    %467 = vmatprep.subr.mxu0 %v392
    %468 = vmatpush1.msra.mxu0 %v391
    %469 = vmatprep.subr.mxu0 %v394
    %470 = vmatpush1.msra.mxu0 %v393
    %471 = vmatprep.subr.mxu0 %v396
    %472 = vmatpush1.msra.mxu0 %v395
    %473 = vmatprep.subr.mxu0 %v398
    %474 = vmatpush1.msra.mxu0 %v397
    %475 = vmatprep.subr.mxu0 %v400
    %476 = vmatpush1.msra.mxu0 %v399
    %477 = vmatprep.subr.mxu0 %v402
    %478 = vmatpush1.msra.mxu0 %v401
    %479 = vmatprep.subr.mxu0 %v404
    %480 = vmatpush1.msra.mxu0 %v403
    %481 = vmatprep.subr.mxu0 %v406
    %482 = vmatpush1.msra.mxu0 %v405
    %483 = vmatprep.subr.mxu0 %v408
    %484 = vmatpush1.msra.mxu0 %v407
    %485 = vmatprep.subr.mxu0 %v410
    %486 = vmatpush1.msra.mxu0 %v409
    %487 = vmatprep.subr.mxu0 %v412
    %488 = vmatpush1.msra.mxu0 %v411
    %489 = vmatprep.subr.mxu0 %v414
    %490 = vmatpush1.msra.mxu0 %v413
    %491 = vmatprep.subr.mxu0 %v416
    %492 = vmatpush1.msra.mxu0 %v415
    %493 = vmatprep.subr.mxu0 %v418
    %494 = vmatpush1.msra.mxu0 %v417
    %495 = vmatprep.subr.mxu0 %v420
    %496 = vmatpush1.msra.mxu0 %v419
    %497 = vmatprep.subr.mxu0 %v422
    %498 = vmatpush1.msra.mxu0 %v421
    %499 = vmatprep.subr.mxu0 %v424
    %500 = vmatpush1.msra.mxu0 %v423
    %501 = vmatprep.subr.mxu0 %v426
    %502 = vmatpush1.msra.mxu0 %v425
    %503 = vmatprep.subr.mxu0 %v428
    %504 = vmatpush1.msra.mxu0 %v427
    %505 = vmatprep.subr.mxu0 %v430
    %506 = vmatpush1.msra.mxu0 %v429
    %507 = vmatprep.subr.mxu0 %v432
    %508 = vmatpush1.msra.mxu0 %v431
    %509 = vmatprep.subr.mxu0 %v434
    %510 = vmatpush1.msra.mxu0 %v433
    %511 = vmatprep.subr.mxu0 %v436
    %512 = vmatpush1.msra.mxu0 %v435
    %513 = vmatprep.subr.mxu0 %v438
    %514 = vmatpush1.msra.mxu0 %v437
    %515 = vmatprep.subr.mxu0 %v440
    %516 = vmatpush1.msra.mxu0 %v439
    %517 = vmatprep.subr.mxu0 %v442
    %518 = vmatpush1.msra.mxu0 %v441
    %519 = vmatprep.subr.mxu0 %v444
    %520 = vmatpush1.msra.mxu0 %v443
    %521 = vmatprep.subr.mxu0 %v446
    %522 = vmatpush1.msra.mxu0 %v445
    %523 = vmatprep.subr.mxu0 %v448
    %524 = vmatpush1.msra.mxu0 %v447
    %525 = vmatprep.subr.mxu0 %v450
    %526 = vmatpush1.msra.mxu0 %v449
    %527 = vmatprep.subr.mxu0 %v452
    %528 = vmatpush1.msra.mxu0 %v451
    %529 = vmatprep.mubr.f32.mxu0 %v388
    %530 = vmatmul.mubr.f32.gmra.mrb[0].mxu0 %v387
    %v531 = vpop.f32.mrb[0].mxu0
    %v532 = vadd.f32 %v458, %v531
    %v533 = vpop.f32.mrb[0].mxu0
    %v534 = vadd.f32 %v462, %v533
    %535 = vdwg.mxu0
    %536 = vst [vmem:[#allocation11] sm:$0xff] %v532
    %537 = vst [vmem:[#allocation11 + $0x8] sm:$0xff] %v534
    // Predicated region
    $region50: #{tpu_custom_call.1} parent=1 // pred_check
      _
    $region51: #{tpu_custom_call.1} parent=1 // pred_check_branch
      %539 = sbr.rel (0) target = $region53
    $region52: #{tpu_custom_call.1} parent=1 // pred_region
      %s541 = ssub.s32 256, 256
      %542 = vsyncadd [#allocation4], %s541
      %s544 = sshll.u32 [#allocation11], 4
      %s545 = int_to_ptr.vmem [resolvable:$true] %s544
      %547 = dma.vmem_to_hbm [thread:$0]  %s545, 256, %s7, [#allocation4]
    $region53: #{tpu_custom_call.1} parent=1 // pred_fallthru
      _
    // Predicated region
    $region54: #{tpu_custom_call.1} parent=1 // pred_check
      _
    $region55: #{tpu_custom_call.1} parent=1 // pred_check_branch
      %549 = sbr.rel (0) target = $region57
    $region56: #{tpu_custom_call.1} parent=1 // pred_region
      %550 = dma.done [#allocation4], 256
    $region57: #{tpu_custom_call.1} parent=1 // pred_fallthru
      _
    %551 = vsyncpa [#allocation3], 1
    %552 = vsyncpa [#allocation6], 1
    %553 = vsyncpa [#allocation9], 1
    %554 = vsyncpa [#allocation4], 1

</llo_original>
